<compile_context>
chip_gen: v7x
topology: tpu7x:2x2x1
jax: 0.10.0
libtpu: 0.0.40
codegen_flags: <defaults>
</compile_context>

<pallas_src>
import jax
import jax.numpy as jnp
import numpy as np
from jax.experimental import pallas as pl
from jax.experimental.pallas import tpu as pltpu


def attention_cell_kernel(
    bh_ref,        # [Bb, T, D]   batch_H block (f32)
    h_ref,         # [Bb, H]      prev hidden (matmul dtype)
    c_ref,         # [Bb, H]      prev cell   (f32)
    ohh_ref,       # [Bb, E+H]    concat([char_onehots, h]) (matmul dtype)
    w_i2h_ref,     # [D, H]       i2h weight, pre-transposed
    w_h2h_ref,     # [H, H]       h2h weight, pre-transposed
    b_h2h_ref,     # [1, H]
    w_score_ref,   # [1, H]       score weight (row vector)
    w_ctx_ref,     # [D, 4H]      w_ih[:, :D].T
    w_eh_ref,      # [E+H, 4H]    [w_ih[:, D:], w_hh].T  (fused)
    b_gates_ref,   # [1, 4H]      b_ih + b_hh
    hc_out_ref,    # [Bb, 2H]     [h_new | c_new]
    alpha_out_ref, # [Bb, T]      lane-dense attention weights
):
    Bb, T, D = bh_ref.shape
    H = w_i2h_ref.shape[1]
    cdt = w_i2h_ref.dtype                      # MXU operand dtype (f32 or bf16)

    bh = bh_ref[...]                           # [Bb, T, D] f32
    c = c_ref[...]                             # [Bb, H]    f32

    # --- attention ----------------------------------------------------------
    # One MXU pass over the whole batch block (T is a multiple of 8, so the
    # flatten is layout-preserving for the f32 input).
    bh2 = bh.reshape(Bb * T, D).astype(cdt)
    proj_H = jnp.dot(bh2, w_i2h_ref[...],
                     preferred_element_type=jnp.float32).reshape(Bb, T, H)
    proj_h = jnp.dot(h_ref[...], w_h2h_ref[...],
                     preferred_element_type=jnp.float32) + b_h2h_ref[...]    # [Bb, H]
    t = jnp.tanh(proj_H + proj_h[:, None, :])                                # [Bb, T, H]

    # Scores as a lane reduction over H -> lane-dense [Bb, T] (T on lanes).
    e = jnp.sum(t * w_score_ref[...][None, :, :], axis=2)                    # [Bb, T]

    # Softmax over T (lane axis): full-vreg lane reductions.
    m = jnp.max(e, axis=1, keepdims=True)                                    # [Bb, 1]
    p = jnp.exp(e - m)                                                       # [Bb, T]
    denom = jnp.sum(p, axis=1, keepdims=True)                                # [Bb, 1]
    r = pl.reciprocal(denom, approx=True)                                    # EUP slot
    r = r * (2.0 - denom * r)        # one Newton step -> ~f32-exact, no VALU divide
    alpha = p * r                                                            # [Bb, T]

    # context = einsum('bt,btd->bd'): broadcast-multiply + reduce over T.
    context = jnp.sum(alpha[:, :, None] * bh, axis=1)                        # [Bb, D] f32

    # --- LSTMCell on concat([context, char_onehots]) -------------------------
    gates = (
        jnp.dot(context.astype(cdt), w_ctx_ref[...], preferred_element_type=jnp.float32)
        + jnp.dot(ohh_ref[...], w_eh_ref[...], preferred_element_type=jnp.float32)
        + b_gates_ref[...]
    )                                                                        # [Bb, 4H] (i,f,g,o)
    # TODO(synk): at production sizes pad H to a multiple of 128 so these gate
    # slices land on lane-tile boundaries (no XLU shuffles).
    i_g = jax.nn.sigmoid(gates[:, 0:H])
    f_g = jax.nn.sigmoid(gates[:, H:2 * H])
    g_g = jnp.tanh(gates[:, 2 * H:3 * H])
    o_g = jax.nn.sigmoid(gates[:, 3 * H:4 * H])
    c_new = f_g * c + i_g * g_g
    h_new = o_g * jnp.tanh(c_new)

    hc_out_ref[...] = jnp.concatenate([h_new, c_new], axis=1)   # single coalesced store
    alpha_out_ref[...] = alpha                                  # lane-dense store


def _choose_block_b(B, T, D, itemsize=4, max_block_bytes=4 << 20):
    """Largest batch block whose batch_H tile stays within ~4 MiB, so the
    double-buffered stream (~8 MiB) plus single-copy weights fits comfortably
    even in v7x's 64 MiB per-TC VMEM.  Leading block dim kept 8-aligned when
    it does not cover the full (padded) batch."""
    per_b = max(1, T * D * itemsize)
    bb = max(1, min(B, max_block_bytes // per_b))
    if bb < B:
        bb = max(8, (bb // 8) * 8)
    return bb


def attention_cell(prev_hidden, batch_H, char_onehots, params, *,
                   matmul_dtype=jnp.float32, block_b=None):
    """Pallas wrapper. Returns ((h_new, c_new), alpha[B, T, 1]) like PyTorch."""
    h, c = prev_hidden
    B, T, D = batch_H.shape
    H = h.shape[1]
    E = char_onehots.shape[1]
    f32 = jnp.float32
    cdt = matmul_dtype

    # --- weight prep: transpose/fuse ONCE, outside the kernel ----------------
    w_i2h_T = params["w_i2h"].T.astype(cdt)                                  # [D, H]
    w_h2h_T = params["w_h2h"].T.astype(cdt)                                  # [H, H]
    b_h2h = params["b_h2h"].reshape(1, H).astype(f32)
    w_score = params["w_score"].reshape(1, H).astype(f32)
    w_ih = params["w_ih"]                                                    # [4H, D+E]
    w_ctx_T = w_ih[:, :D].T.astype(cdt)                                      # [D, 4H]
    w_eh_T = jnp.concatenate([w_ih[:, D:], params["w_hh"]], axis=1).T.astype(cdt)  # [E+H, 4H]
    b_gates = (params["b_ih"] + params["b_hh"]).reshape(1, 4 * H).astype(f32)

    # --- activation prep ------------------------------------------------------
    bh = batch_H.astype(f32)                    # f32 stream; cast to cdt in-kernel
    h_mm = h.astype(cdt)                        # matmul-only operand
    c_f = c.astype(f32)                         # elementwise-only operand
    ohh = jnp.concatenate([char_onehots, h], axis=1).astype(cdt)             # [B, E+H]

    # --- batch blocking (+ zero-padding to a whole number of blocks) ---------
    if block_b is None:
        block_b = _choose_block_b(B, T, D)
    nb = pl.cdiv(B, block_b)
    if nb > 1 and block_b % 8 != 0:
        block_b = ((block_b + 7) // 8) * 8
        nb = pl.cdiv(B, block_b)
    Bp = nb * block_b
    if Bp != B:
        padb = Bp - B
        bh = jnp.pad(bh, ((0, padb), (0, 0), (0, 0)))
        h_mm = jnp.pad(h_mm, ((0, padb), (0, 0)))
        c_f = jnp.pad(c_f, ((0, padb), (0, 0)))
        ohh = jnp.pad(ohh, ((0, padb), (0, 0)))

    row3 = lambda b: (b, 0, 0)
    row2 = lambda b: (b, 0)
    const2 = lambda b: (0, 0)

    in_specs = [
        pl.BlockSpec((block_b, T, D), row3),      # batch_H block
        pl.BlockSpec((block_b, H), row2),         # h
        pl.BlockSpec((block_b, H), row2),         # c
        pl.BlockSpec((block_b, E + H), row2),     # [onehot | h]
        pl.BlockSpec((D, H), const2),             # w_i2h^T
        pl.BlockSpec((H, H), const2),             # w_h2h^T
        pl.BlockSpec((1, H), const2),             # b_h2h
        pl.BlockSpec((1, H), const2),             # w_score
        pl.BlockSpec((D, 4 * H), const2),         # w_ctx^T
        pl.BlockSpec((E + H, 4 * H), const2),     # w_eh^T
        pl.BlockSpec((1, 4 * H), const2),         # fused bias
    ]
    out_specs = (
        pl.BlockSpec((block_b, 2 * H), row2),     # [h_new | c_new]
        pl.BlockSpec((block_b, T), row2),         # alpha, lane-dense
    )
    out_shape = (
        jax.ShapeDtypeStruct((Bp, 2 * H), jnp.float32),
        jax.ShapeDtypeStruct((Bp, T), jnp.float32),
    )

    hc, alpha2 = pl.pallas_call(
        attention_cell_kernel,
        grid=(nb,),
        in_specs=in_specs,
        out_specs=out_specs,
        out_shape=out_shape,
        compiler_params=pltpu.CompilerParams(
            dimension_semantics=("parallel",)),   # shard batch blocks across TCs (v7x)
    )(bh, h_mm, c_f, ohh, w_i2h_T, w_h2h_T, b_h2h, w_score,
      w_ctx_T, w_eh_T, b_gates)

    h_new = hc[:B, :H]
    c_new = hc[:B, H:]
    alpha = alpha2[:B, :, None]                   # lane-dense in-kernel, [B, T, 1] API
    return (h_new, c_new), alpha


def reference(prev_hidden, batch_H, char_onehots, params):
    """Pure-JAX mirror of the PyTorch forward for verification."""
    h, c = prev_hidden
    H = h.shape[1]
    bh_proj = batch_H @ params["w_i2h"].T
    h_proj = h @ params["w_h2h"].T + params["b_h2h"]
    e = jnp.tanh(bh_proj + h_proj[:, None, :]) @ params["w_score"].T        # [B,T,1]
    alpha = jax.nn.softmax(e, axis=1)
    context = jnp.squeeze(jnp.swapaxes(alpha, 1, 2) @ batch_H, axis=1)      # [B,D]
    x = jnp.concatenate([context, char_onehots], axis=1)
    gates = x @ params["w_ih"].T + params["b_ih"] + h @ params["w_hh"].T + params["b_hh"]
    i_g = jax.nn.sigmoid(gates[:, 0:H])
    f_g = jax.nn.sigmoid(gates[:, H:2 * H])
    g_g = jnp.tanh(gates[:, 2 * H:3 * H])
    o_g = jax.nn.sigmoid(gates[:, 3 * H:4 * H])
    c_new = f_g * c + i_g * g_g
    h_new = o_g * jnp.tanh(c_new)
    return (h_new, c_new), alpha


if __name__ == "__main__":
    B, T = 2, 8
    D, H, E = 32, 32, 16          # input_size, hidden_size, num_embeddings

    key = jax.random.PRNGKey(0)
    ks = jax.random.split(key, 12)

    params = {
        "w_i2h":   0.1 * jax.random.normal(ks[0], (H, D), jnp.float32),
        "w_h2h":   0.1 * jax.random.normal(ks[1], (H, H), jnp.float32),
        "b_h2h":   0.1 * jax.random.normal(ks[2], (H,), jnp.float32),
        "w_score": 0.1 * jax.random.normal(ks[3], (1, H), jnp.float32),
        "w_ih":    0.1 * jax.random.normal(ks[4], (4 * H, D + E), jnp.float32),
        "w_hh":    0.1 * jax.random.normal(ks[5], (4 * H, H), jnp.float32),
        "b_ih":    0.1 * jax.random.normal(ks[6], (4 * H,), jnp.float32),
        "b_hh":    0.1 * jax.random.normal(ks[7], (4 * H,), jnp.float32),
    }

    h0 = jax.random.normal(ks[8], (B, H), jnp.float32)
    c0 = jax.random.normal(ks[9], (B, H), jnp.float32)
    batch_H = jax.random.normal(ks[10], (B, T, D), jnp.float32)
    ids = jax.random.randint(ks[11], (B,), 0, E)
    char_onehots = jax.nn.one_hot(ids, E, dtype=jnp.float32)

    (h_ref, c_ref), alpha_ref = reference((h0, c0), batch_H, char_onehots, params)

    # f32 MXU path: tight parity with the f32 reference.
    (h_new, c_new), alpha = attention_cell((h0, c0), batch_H, char_onehots, params)
    jax.block_until_ready((h_new, c_new, alpha))
    np.testing.assert_allclose(np.asarray(h_new), np.asarray(h_ref), rtol=1e-5, atol=1e-5)
    np.testing.assert_allclose(np.asarray(c_new), np.asarray(c_ref), rtol=1e-5, atol=1e-5)
    np.testing.assert_allclose(np.asarray(alpha), np.asarray(alpha_ref), rtol=1e-5, atol=1e-5)
    assert h_new.shape == (B, H) and c_new.shape == (B, H) and alpha.shape == (B, T, 1)

    # bf16 MXU path (production setting on v6e/v7x): f32 accumulation + f32
    # elementwise, so only a loose tolerance vs. the f32 reference is expected.
    (h_bf, c_bf), alpha_bf = attention_cell((h0, c0), batch_H, char_onehots, params,
                                            matmul_dtype=jnp.bfloat16)
    jax.block_until_ready((h_bf, c_bf, alpha_bf))
    np.testing.assert_allclose(np.asarray(h_bf), np.asarray(h_ref), rtol=5e-2, atol=5e-2)
    np.testing.assert_allclose(np.asarray(c_bf), np.asarray(c_ref), rtol=5e-2, atol=5e-2)
    np.testing.assert_allclose(np.asarray(alpha_bf), np.asarray(alpha_ref), rtol=5e-2, atol=5e-2)

    print("KERNEL_OK")
</pallas_src>

<mosaic_0001>
module attributes {stable_mosaic.version = 11 : i64} {
  func.func @attention_cell_kernel(%arg0: i32, %arg1: memref<2x8x32xf32, #tpu.memory_space<vmem>>, %arg2: memref<2x32xf32, #tpu.memory_space<vmem>>, %arg3: memref<2x32xf32, #tpu.memory_space<vmem>>, %arg4: memref<2x48xf32, #tpu.memory_space<vmem>>, %arg5: memref<32x32xf32, #tpu.memory_space<vmem>>, %arg6: memref<32x32xf32, #tpu.memory_space<vmem>>, %arg7: memref<1x32xf32, #tpu.memory_space<vmem>>, %arg8: memref<1x32xf32, #tpu.memory_space<vmem>>, %arg9: memref<32x128xf32, #tpu.memory_space<vmem>>, %arg10: memref<48x128xf32, #tpu.memory_space<vmem>>, %arg11: memref<1x128xf32, #tpu.memory_space<vmem>>, %arg12: memref<2x64xf32, #tpu.memory_space<vmem>>, %arg13: memref<2x8xf32, #tpu.memory_space<vmem>>) attributes {dimension_semantics = [#tpu.dimension_semantics<parallel>], iteration_bounds = array<i64: 1>, scalar_prefetch = 0 : i64, scratch_operands = 0 : i64, tpu.core_type = #tpu.core_type<tc>, window_params = [{transform_indices = @transform_0, window_bounds = array<i64: 2, 8, 32>}, {transform_indices = @transform_1, window_bounds = array<i64: 2, 32>}, {transform_indices = @transform_2, window_bounds = array<i64: 2, 32>}, {transform_indices = @transform_3, window_bounds = array<i64: 2, 48>}, {pipeline_mode = #tpu.pipeline_mode<synchronous>, transform_indices = @transform_4, window_bounds = array<i64: 32, 32>}, {pipeline_mode = #tpu.pipeline_mode<synchronous>, transform_indices = @transform_5, window_bounds = array<i64: 32, 32>}, {pipeline_mode = #tpu.pipeline_mode<synchronous>, transform_indices = @transform_6, window_bounds = array<i64: 1, 32>}, {pipeline_mode = #tpu.pipeline_mode<synchronous>, transform_indices = @transform_7, window_bounds = array<i64: 1, 32>}, {pipeline_mode = #tpu.pipeline_mode<synchronous>, transform_indices = @transform_8, window_bounds = array<i64: 32, 128>}, {pipeline_mode = #tpu.pipeline_mode<synchronous>, transform_indices = @transform_9, window_bounds = array<i64: 48, 128>}, {pipeline_mode = #tpu.pipeline_mode<synchronous>, transform_indices = @transform_10, window_bounds = array<i64: 1, 128>}, {transform_indices = @transform_11, window_bounds = array<i64: 2, 64>}, {transform_indices = @transform_12, window_bounds = array<i64: 2, 8>}]} {
    %c0 = arith.constant 0 : index
    %c0_0 = arith.constant 0 : index
    %c0_1 = arith.constant 0 : index
    %0 = vector.load %arg1[%c0, %c0_0, %c0_1] : memref<2x8x32xf32, #tpu.memory_space<vmem>>, vector<2x8x32xf32>
    %c0_2 = arith.constant 0 : index
    %c0_3 = arith.constant 0 : index
    %1 = vector.load %arg3[%c0_2, %c0_3] : memref<2x32xf32, #tpu.memory_space<vmem>>, vector<2x32xf32>
    %2 = vector.shape_cast %0 : vector<2x8x32xf32> to vector<16x32xf32>
    %c0_4 = arith.constant 0 : index
    %c0_5 = arith.constant 0 : index
    %3 = vector.load %arg5[%c0_4, %c0_5] : memref<32x32xf32, #tpu.memory_space<vmem>>, vector<32x32xf32>
    %cst = arith.constant dense<0.000000e+00> : vector<16x32xf32>
    %4 = tpu.matmul %2, %3, %cst {dimension_numbers = #tpu.dot_dimension_numbers<[1], [0], [0], [1], [0, 0, 1, 1], [], []>} : vector<16x32xf32>, vector<32x32xf32>, vector<16x32xf32> -> vector<16x32xf32>
    %5 = vector.shape_cast %4 : vector<16x32xf32> to vector<2x8x32xf32>
    %c0_6 = arith.constant 0 : index
    %c0_7 = arith.constant 0 : index
    %6 = vector.load %arg2[%c0_6, %c0_7] : memref<2x32xf32, #tpu.memory_space<vmem>>, vector<2x32xf32>
    %c0_8 = arith.constant 0 : index
    %c0_9 = arith.constant 0 : index
    %7 = vector.load %arg6[%c0_8, %c0_9] : memref<32x32xf32, #tpu.memory_space<vmem>>, vector<32x32xf32>
    %cst_10 = arith.constant dense<0.000000e+00> : vector<2x32xf32>
    %8 = tpu.matmul %6, %7, %cst_10 {dimension_numbers = #tpu.dot_dimension_numbers<[1], [0], [0], [1], [0, 0, 1, 1], [], []>} : vector<2x32xf32>, vector<32x32xf32>, vector<2x32xf32> -> vector<2x32xf32>
    %c0_11 = arith.constant 0 : index
    %c0_12 = arith.constant 0 : index
    %9 = vector.load %arg7[%c0_11, %c0_12] : memref<1x32xf32, #tpu.memory_space<vmem>>, vector<1x32xf32>
    %10 = vector.broadcast %9 : vector<1x32xf32> to vector<2x32xf32>
    %11 = arith.addf %8, %10 : vector<2x32xf32>
    %12 = vector.shape_cast %11 : vector<2x32xf32> to vector<2x1x32xf32>
    %13 = vector.broadcast %12 : vector<2x1x32xf32> to vector<2x8x32xf32>
    %14 = arith.addf %5, %13 : vector<2x8x32xf32>
    %15 = math.tanh %14 : vector<2x8x32xf32>
    %c0_13 = arith.constant 0 : index
    %c0_14 = arith.constant 0 : index
    %16 = vector.load %arg8[%c0_13, %c0_14] : memref<1x32xf32, #tpu.memory_space<vmem>>, vector<1x32xf32>
    %17 = vector.shape_cast %16 : vector<1x32xf32> to vector<1x1x32xf32>
    %18 = vector.broadcast %17 : vector<1x1x32xf32> to vector<2x8x32xf32>
    %19 = arith.mulf %15, %18 : vector<2x8x32xf32>
    %cst_15 = arith.constant dense<0.000000e+00> : vector<2x8xf32>
    %20 = vector.multi_reduction <add>, %19, %cst_15 [2] : vector<2x8x32xf32> to vector<2x8xf32>
    %cst_16 = arith.constant dense<0xFF800000> : vector<2xf32>
    %21 = vector.multi_reduction <maximumf>, %20, %cst_16 [1] : vector<2x8xf32> to vector<2xf32>
    %22 = vector.shape_cast %21 : vector<2xf32> to vector<2x1xf32>
    %23 = vector.broadcast %22 : vector<2x1xf32> to vector<2x8xf32>
    %24 = arith.subf %20, %23 : vector<2x8xf32>
    %25 = math.exp %24 : vector<2x8xf32>
    %cst_17 = arith.constant dense<0.000000e+00> : vector<2xf32>
    %26 = vector.multi_reduction <add>, %25, %cst_17 [1] : vector<2x8xf32> to vector<2xf32>
    %27 = vector.shape_cast %26 : vector<2xf32> to vector<2x1xf32>
    %28 = tpu.reciprocal %27 {approx = true} : vector<2x1xf32> -> vector<2x1xf32>
    %29 = arith.mulf %27, %28 : vector<2x1xf32>
    %cst_18 = arith.constant 2.000000e+00 : f32
    %30 = vector.broadcast %cst_18 : f32 to vector<2x1xf32>
    %31 = arith.subf %30, %29 : vector<2x1xf32>
    %32 = arith.mulf %28, %31 : vector<2x1xf32>
    %33 = vector.broadcast %32 : vector<2x1xf32> to vector<2x8xf32>
    %34 = arith.mulf %25, %33 : vector<2x8xf32>
    %35 = vector.shape_cast %34 : vector<2x8xf32> to vector<2x8x1xf32>
    %36 = vector.broadcast %35 : vector<2x8x1xf32> to vector<2x8x32xf32>
    %37 = arith.mulf %36, %0 : vector<2x8x32xf32>
    %cst_19 = arith.constant dense<0.000000e+00> : vector<2x32xf32>
    %38 = vector.multi_reduction <add>, %37, %cst_19 [1] : vector<2x8x32xf32> to vector<2x32xf32>
    %c0_20 = arith.constant 0 : index
    %c0_21 = arith.constant 0 : index
    %39 = vector.load %arg9[%c0_20, %c0_21] : memref<32x128xf32, #tpu.memory_space<vmem>>, vector<32x128xf32>
    %cst_22 = arith.constant dense<0.000000e+00> : vector<2x128xf32>
    %40 = tpu.matmul %38, %39, %cst_22 {dimension_numbers = #tpu.dot_dimension_numbers<[1], [0], [0], [1], [0, 0, 1, 1], [], []>} : vector<2x32xf32>, vector<32x128xf32>, vector<2x128xf32> -> vector<2x128xf32>
    %c0_23 = arith.constant 0 : index
    %c0_24 = arith.constant 0 : index
    %41 = vector.load %arg4[%c0_23, %c0_24] : memref<2x48xf32, #tpu.memory_space<vmem>>, vector<2x48xf32>
    %c0_25 = arith.constant 0 : index
    %c0_26 = arith.constant 0 : index
    %42 = vector.load %arg10[%c0_25, %c0_26] : memref<48x128xf32, #tpu.memory_space<vmem>>, vector<48x128xf32>
    %cst_27 = arith.constant dense<0.000000e+00> : vector<2x128xf32>
    %43 = tpu.matmul %41, %42, %cst_27 {dimension_numbers = #tpu.dot_dimension_numbers<[1], [0], [0], [1], [0, 0, 1, 1], [], []>} : vector<2x48xf32>, vector<48x128xf32>, vector<2x128xf32> -> vector<2x128xf32>
    %44 = arith.addf %40, %43 : vector<2x128xf32>
    %c0_28 = arith.constant 0 : index
    %c0_29 = arith.constant 0 : index
    %45 = vector.load %arg11[%c0_28, %c0_29] : memref<1x128xf32, #tpu.memory_space<vmem>>, vector<1x128xf32>
    %46 = vector.broadcast %45 : vector<1x128xf32> to vector<2x128xf32>
    %47 = arith.addf %44, %46 : vector<2x128xf32>
    %48 = vector.extract_strided_slice %47 {offsets = [0, 0], sizes = [2, 32], strides = [1, 1]} : vector<2x128xf32> to vector<2x32xf32>
    %49 = arith.negf %48 : vector<2x32xf32>
    %50 = math.exp %49 : vector<2x32xf32>
    %cst_30 = arith.constant 1.000000e+00 : f32
    %51 = vector.broadcast %cst_30 : f32 to vector<2x32xf32>
    %52 = arith.addf %51, %50 : vector<2x32xf32>
    %53 = arith.divf %51, %52 : vector<2x32xf32>
    %54 = vector.extract_strided_slice %47 {offsets = [0, 32], sizes = [2, 32], strides = [1, 1]} : vector<2x128xf32> to vector<2x32xf32>
    %55 = arith.negf %54 : vector<2x32xf32>
    %56 = math.exp %55 : vector<2x32xf32>
    %cst_31 = arith.constant 1.000000e+00 : f32
    %57 = vector.broadcast %cst_31 : f32 to vector<2x32xf32>
    %58 = arith.addf %57, %56 : vector<2x32xf32>
    %59 = arith.divf %57, %58 : vector<2x32xf32>
    %60 = vector.extract_strided_slice %47 {offsets = [0, 64], sizes = [2, 32], strides = [1, 1]} : vector<2x128xf32> to vector<2x32xf32>
    %61 = math.tanh %60 : vector<2x32xf32>
    %62 = vector.extract_strided_slice %47 {offsets = [0, 96], sizes = [2, 32], strides = [1, 1]} : vector<2x128xf32> to vector<2x32xf32>
    %63 = arith.negf %62 : vector<2x32xf32>
    %64 = math.exp %63 : vector<2x32xf32>
    %cst_32 = arith.constant 1.000000e+00 : f32
    %65 = vector.broadcast %cst_32 : f32 to vector<2x32xf32>
    %66 = arith.addf %65, %64 : vector<2x32xf32>
    %67 = arith.divf %65, %66 : vector<2x32xf32>
    %68 = arith.mulf %59, %1 : vector<2x32xf32>
    %69 = arith.mulf %53, %61 : vector<2x32xf32>
    %70 = arith.addf %68, %69 : vector<2x32xf32>
    %71 = math.tanh %70 : vector<2x32xf32>
    %72 = arith.mulf %67, %71 : vector<2x32xf32>
    %73 = tpu.concatenate %72, %70 in 1 : vector<2x32xf32>, vector<2x32xf32> -> vector<2x64xf32>
    %c0_33 = arith.constant 0 : index
    %c0_34 = arith.constant 0 : index
    %74 = vector.load %arg12[%c0_33, %c0_34] : memref<2x64xf32, #tpu.memory_space<vmem>>, vector<2x64xf32>
    tpu.vector_store %arg12[%c0_33, %c0_34], %73 {strides = array<i32>} : memref<2x64xf32, #tpu.memory_space<vmem>>, vector<2x64xf32>,
    %c0_35 = arith.constant 0 : index
    %c0_36 = arith.constant 0 : index
    %75 = vector.load %arg13[%c0_35, %c0_36] : memref<2x8xf32, #tpu.memory_space<vmem>>, vector<2x8xf32>
    tpu.vector_store %arg13[%c0_35, %c0_36], %34 {strides = array<i32>} : memref<2x8xf32, #tpu.memory_space<vmem>>, vector<2x8xf32>,
    return
  }
  func.func @transform_0(%arg0: i32) -> (i32, i32, i32) {
    %c0_i32 = arith.constant 0 : i32
    %c0_i32_0 = arith.constant 0 : i32
    %c0_i32_1 = arith.constant 0 : i32
    return %arg0, %c0_i32, %c0_i32_0 : i32, i32, i32
  }
  func.func @transform_1(%arg0: i32) -> (i32, i32) {
    %c0_i32 = arith.constant 0 : i32
    %c0_i32_0 = arith.constant 0 : i32
    return %arg0, %c0_i32 : i32, i32
  }
  func.func @transform_2(%arg0: i32) -> (i32, i32) {
    %c0_i32 = arith.constant 0 : i32
    %c0_i32_0 = arith.constant 0 : i32
    return %arg0, %c0_i32 : i32, i32
  }
  func.func @transform_3(%arg0: i32) -> (i32, i32) {
    %c0_i32 = arith.constant 0 : i32
    %c0_i32_0 = arith.constant 0 : i32
    return %arg0, %c0_i32 : i32, i32
  }
  func.func @transform_4(%arg0: i32) -> (i32, i32) {
    %c0_i32 = arith.constant 0 : i32
    %c0_i32_0 = arith.constant 0 : i32
    %c0_i32_1 = arith.constant 0 : i32
    return %c0_i32, %c0_i32_0 : i32, i32
  }
  func.func @transform_5(%arg0: i32) -> (i32, i32) {
    %c0_i32 = arith.constant 0 : i32
    %c0_i32_0 = arith.constant 0 : i32
    %c0_i32_1 = arith.constant 0 : i32
    return %c0_i32, %c0_i32_0 : i32, i32
  }
  func.func @transform_6(%arg0: i32) -> (i32, i32) {
    %c0_i32 = arith.constant 0 : i32
    %c0_i32_0 = arith.constant 0 : i32
    %c0_i32_1 = arith.constant 0 : i32
    return %c0_i32, %c0_i32_0 : i32, i32
  }
  func.func @transform_7(%arg0: i32) -> (i32, i32) {
    %c0_i32 = arith.constant 0 : i32
    %c0_i32_0 = arith.constant 0 : i32
    %c0_i32_1 = arith.constant 0 : i32
    return %c0_i32, %c0_i32_0 : i32, i32
  }
  func.func @transform_8(%arg0: i32) -> (i32, i32) {
    %c0_i32 = arith.constant 0 : i32
    %c0_i32_0 = arith.constant 0 : i32
    %c0_i32_1 = arith.constant 0 : i32
    return %c0_i32, %c0_i32_0 : i32, i32
  }
  func.func @transform_9(%arg0: i32) -> (i32, i32) {
    %c0_i32 = arith.constant 0 : i32
    %c0_i32_0 = arith.constant 0 : i32
    %c0_i32_1 = arith.constant 0 : i32
    return %c0_i32, %c0_i32_0 : i32, i32
  }
  func.func @transform_10(%arg0: i32) -> (i32, i32) {
    %c0_i32 = arith.constant 0 : i32
    %c0_i32_0 = arith.constant 0 : i32
    %c0_i32_1 = arith.constant 0 : i32
    return %c0_i32, %c0_i32_0 : i32, i32
  }
  func.func @transform_11(%arg0: i32) -> (i32, i32) {
    %c0_i32 = arith.constant 0 : i32
    %c0_i32_0 = arith.constant 0 : i32
    return %arg0, %c0_i32 : i32, i32
  }
  func.func @transform_12(%arg0: i32) -> (i32, i32) {
    %c0_i32 = arith.constant 0 : i32
    %c0_i32_0 = arith.constant 0 : i32
    return %arg0, %c0_i32 : i32, i32
  }
}

</mosaic_0001>

<llo_original>
// kernel: tpu_custom_call.1
$region0: #{tpu_custom_call.1}
  #allocation0 [shape = 'u32[]', space=smem, size = 0x4, offset = 0x4, fixed_abs, tag = 'smem constant byte address 0x4 - core index']
  #allocation1 [shape = 'u32[144,128]{1,0:T(1,128)}', space=vmem, size = 0x12000, scoped, tag = 'internal scratch']
  %s0 = inlined_call_operand.hbm [shape: f32[2,8,32], index: 0, kind: input, shape index: {}]
  %s1 = inlined_call_operand.vmem [shape: f32[2,32], index: 1, kind: input, shape index: {}]
  %s2 = inlined_call_operand.vmem [shape: f32[2,32], index: 2, kind: input, shape index: {}]
  %s3 = inlined_call_operand.vmem [shape: f32[2,48], index: 3, kind: input, shape index: {}]
  %s4 = inlined_call_operand.hbm [shape: f32[32,32], index: 4, kind: input, shape index: {}]
  %s5 = inlined_call_operand.hbm [shape: f32[32,32], index: 5, kind: input, shape index: {}]
  %s6 = inlined_call_operand.vmem [shape: f32[1,32], index: 6, kind: input, shape index: {}]
  %s7 = inlined_call_operand.vmem [shape: f32[1,32], index: 7, kind: input, shape index: {}]
  %s8 = inlined_call_operand.hbm [shape: f32[32,128], index: 8, kind: input, shape index: {}]
  %s9 = inlined_call_operand.hbm [shape: f32[48,128], index: 9, kind: input, shape index: {}]
  %s10 = inlined_call_operand.vmem [shape: f32[1,128], index: 10, kind: input, shape index: {}]
  %s11 = inlined_call_operand.hbm [shape: f32[2,64], index: 11, kind: output, shape index: {0}]
  %s12 = inlined_call_operand.hbm [shape: f32[2,8], index: 12, kind: output, shape index: {1}]
  %13 = xla_tuple %s11, %s12
  %s14 = sld [smem:[#allocation0]]
  $region82: #{tpu_custom_call.1} parent=0
    _
  %s16 = ssub.s32 1, %s14
  %s17 = scalar_select 0, %s16, %s14
  $region1: #{tpu_custom_call.1} parent=0
    #allocation2 [shape = 'u8[8192]{0}', space=vmem, size = 0x2000, scoped, tag = 'input window, operand 0, single buffered']
    #allocation3 [shape = 's32[1]{0}', space=sflag, size = 0x4, scoped, tag = 'scoped memory for tpu_custom_call.1']
    #allocation4 [shape = 's32[1]{0}', space=sflag, size = 0x4, scoped, tag = 'scoped memory for tpu_custom_call.1']
    #allocation5 [shape = 'u8[16384]{0}', space=vmem, size = 0x4000, scoped, tag = 'input window, operand 4, single buffered']
    #allocation6 [shape = 's32[1]{0}', space=sflag, size = 0x4, scoped, tag = 'scoped memory for tpu_custom_call.1']
    #allocation7 [shape = 'u8[16384]{0}', space=vmem, size = 0x4000, scoped, tag = 'input window, operand 5, single buffered']
    #allocation8 [shape = 'u8[16384]{0}', space=vmem, size = 0x4000, scoped, tag = 'input window, operand 8, single buffered']
    #allocation9 [shape = 's32[1]{0}', space=sflag, size = 0x4, scoped, tag = 'scoped memory for tpu_custom_call.1']
    #allocation10 [shape = 'u8[24576]{0}', space=vmem, size = 0x6000, scoped, tag = 'input window, operand 9, single buffered']
    #allocation11 [shape = 'u8[1024]{0}', space=vmem, size = 0x400, scoped, tag = 'output window, operand 0, single buffered']
    #allocation12 [shape = 'u8[1024]{0}', space=vmem, size = 0x400, scoped, tag = 'output window, operand 1, single buffered']
    #allocation13 [shape = 's32[1]{0}', space=sflag, size = 0x4, scoped, tag = 'scoped memory for tpu_custom_call.1']
    %18 = vsyncpa [#allocation3], 0
    %19 = vsyncpa [#allocation6], 0
    %20 = vsyncpa [#allocation9], 0
    %21 = vsyncpa [#allocation4], 0
    %22 = vsyncpa [#allocation13], 0
    // Predicated region
    $region2: #{tpu_custom_call.1} parent=1 // pred_check
      _
    $region3: #{tpu_custom_call.1} parent=1 // pred_check_branch
      %24 = sbr.rel (0) target = $region5
    $region4: #{tpu_custom_call.1} parent=1 // pred_region
      %s26 = ssub.s32 256, 256
      %27 = vsyncadd [#allocation3], %s26
      %s28 = sshll.u32 [#allocation2], 4
      %s29 = int_to_ptr.vmem [resolvable:$true] %s28
      %34 = dma.hbm_to_vmem [thread:$0]  %s0, 256, %s29, [#allocation3], 128, 128, 8
    $region5: #{tpu_custom_call.1} parent=1 // pred_fallthru
      _
    // Predicated region
    $region6: #{tpu_custom_call.1} parent=1 // pred_check
      _
    $region7: #{tpu_custom_call.1} parent=1 // pred_check_branch
      %36 = sbr.rel (0) target = $region9
    $region8: #{tpu_custom_call.1} parent=1 // pred_region
      _
    $region9: #{tpu_custom_call.1} parent=1 // pred_fallthru
      _
    // Predicated region
    $region10: #{tpu_custom_call.1} parent=1 // pred_check
      _
    $region11: #{tpu_custom_call.1} parent=1 // pred_check_branch
      %38 = sbr.rel (0) target = $region13
    $region12: #{tpu_custom_call.1} parent=1 // pred_region
      _
    $region13: #{tpu_custom_call.1} parent=1 // pred_fallthru
      _
    // Predicated region
    $region14: #{tpu_custom_call.1} parent=1 // pred_check
      _
    $region15: #{tpu_custom_call.1} parent=1 // pred_check_branch
      %40 = sbr.rel (0) target = $region17
    $region16: #{tpu_custom_call.1} parent=1 // pred_region
      _
    $region17: #{tpu_custom_call.1} parent=1 // pred_fallthru
      _
    // Predicated region
    $region18: #{tpu_custom_call.1} parent=1 // pred_check
      _
    $region19: #{tpu_custom_call.1} parent=1 // pred_check_branch
      %42 = sbr.rel (0) target = $region21
    $region20: #{tpu_custom_call.1} parent=1 // pred_region
      %s44 = ssub.s32 512, 512
      %45 = vsyncadd [#allocation6], %s44
      %s46 = sshll.u32 [#allocation5], 4
      %s47 = int_to_ptr.vmem [resolvable:$true] %s46
      %52 = dma.hbm_to_vmem [thread:$0]  %s4, 512, %s47, [#allocation6], 128, 128, 8
    $region21: #{tpu_custom_call.1} parent=1 // pred_fallthru
      _
    // Predicated region
    $region22: #{tpu_custom_call.1} parent=1 // pred_check
      _
    $region23: #{tpu_custom_call.1} parent=1 // pred_check_branch
      %54 = sbr.rel (0) target = $region25
    $region24: #{tpu_custom_call.1} parent=1 // pred_region
      %s56 = ssub.s32 512, 512
      %57 = vsyncadd [#allocation6], %s56
      %s58 = sshll.u32 [#allocation7], 4
      %s59 = int_to_ptr.vmem [resolvable:$true] %s58
      %64 = dma.hbm_to_vmem [thread:$0]  %s5, 512, %s59, [#allocation6], 128, 128, 8
    $region25: #{tpu_custom_call.1} parent=1 // pred_fallthru
      _
    // Predicated region
    $region26: #{tpu_custom_call.1} parent=1 // pred_check
      _
    $region27: #{tpu_custom_call.1} parent=1 // pred_check_branch
      %66 = sbr.rel (0) target = $region29
    $region28: #{tpu_custom_call.1} parent=1 // pred_region
      _
    $region29: #{tpu_custom_call.1} parent=1 // pred_fallthru
      _
    // Predicated region
    $region30: #{tpu_custom_call.1} parent=1 // pred_check
      _
    $region31: #{tpu_custom_call.1} parent=1 // pred_check_branch
      %68 = sbr.rel (0) target = $region33
    $region32: #{tpu_custom_call.1} parent=1 // pred_region
      _
    $region33: #{tpu_custom_call.1} parent=1 // pred_fallthru
      _
    // Predicated region
    $region34: #{tpu_custom_call.1} parent=1 // pred_check
      _
    $region35: #{tpu_custom_call.1} parent=1 // pred_check_branch
      %70 = sbr.rel (0) target = $region37
    $region36: #{tpu_custom_call.1} parent=1 // pred_region
      %s72 = ssub.s32 512, 512
      %73 = vsyncadd [#allocation9], %s72
      %s74 = sshll.u32 [#allocation8], 4
      %s75 = int_to_ptr.vmem [resolvable:$true] %s74
      %80 = dma.hbm_to_vmem [thread:$0]  %s8, 512, %s75, [#allocation9], 128, 128, 8
    $region37: #{tpu_custom_call.1} parent=1 // pred_fallthru
      _
    // Predicated region
    $region38: #{tpu_custom_call.1} parent=1 // pred_check
      _
    $region39: #{tpu_custom_call.1} parent=1 // pred_check_branch
      %82 = sbr.rel (0) target = $region41
    $region40: #{tpu_custom_call.1} parent=1 // pred_region
      %s84 = ssub.s32 768, 768
      %85 = vsyncadd [#allocation9], %s84
      %s86 = sshll.u32 [#allocation10], 4
      %s87 = int_to_ptr.vmem [resolvable:$true] %s86
      %92 = dma.hbm_to_vmem [thread:$0]  %s9, 768, %s87, [#allocation9], 128, 128, 8
    $region41: #{tpu_custom_call.1} parent=1 // pred_fallthru
      _
    // Predicated region
    $region42: #{tpu_custom_call.1} parent=1 // pred_check
      _
    $region43: #{tpu_custom_call.1} parent=1 // pred_check_branch
      %94 = sbr.rel (0) target = $region45
    $region44: #{tpu_custom_call.1} parent=1 // pred_region
      _
    $region45: #{tpu_custom_call.1} parent=1 // pred_fallthru
      _
    // Predicated region
    $region46: #{tpu_custom_call.1} parent=1 // pred_check
      _
    $region47: #{tpu_custom_call.1} parent=1 // pred_check_branch
      %96 = sbr.rel (0) target = $region49
    $region48: #{tpu_custom_call.1} parent=1 // pred_region
      %97 = dma.done [#allocation3], 256
    $region49: #{tpu_custom_call.1} parent=1 // pred_fallthru
      _
    // Predicated region
    $region50: #{tpu_custom_call.1} parent=1 // pred_check
      _
    $region51: #{tpu_custom_call.1} parent=1 // pred_check_branch
      %99 = sbr.rel (0) target = $region53
    $region52: #{tpu_custom_call.1} parent=1 // pred_region
      %100 = dma.done [#allocation6], 512
    $region53: #{tpu_custom_call.1} parent=1 // pred_fallthru
      _
    // Predicated region
    $region54: #{tpu_custom_call.1} parent=1 // pred_check
      _
    $region55: #{tpu_custom_call.1} parent=1 // pred_check_branch
      %102 = sbr.rel (0) target = $region57
    $region56: #{tpu_custom_call.1} parent=1 // pred_region
      %103 = dma.done [#allocation6], 512
    $region57: #{tpu_custom_call.1} parent=1 // pred_fallthru
      _
    // Predicated region
    $region58: #{tpu_custom_call.1} parent=1 // pred_check
      _
    $region59: #{tpu_custom_call.1} parent=1 // pred_check_branch
      %105 = sbr.rel (0) target = $region61
    $region60: #{tpu_custom_call.1} parent=1 // pred_region
      %106 = dma.done [#allocation9], 512
    $region61: #{tpu_custom_call.1} parent=1 // pred_fallthru
      _
    // Predicated region
    $region62: #{tpu_custom_call.1} parent=1 // pred_check
      _
    $region63: #{tpu_custom_call.1} parent=1 // pred_check_branch
      %108 = sbr.rel (0) target = $region65
    $region64: #{tpu_custom_call.1} parent=1 // pred_region
      %109 = dma.done [#allocation9], 768
    $region65: #{tpu_custom_call.1} parent=1 // pred_fallthru
      _
    %v110 = vld [vmem:[#allocation2] sm:$0xff]
    %v111 = vld [vmem:[#allocation2 + $0x8] sm:$0xff]
    %v112 = vld [vmem:[%s2] sm:$0x3]
    %v113 = vld [vmem:[#allocation5] sm:$0xff]
    %v114 = vld [vmem:[#allocation5 + $0x8] sm:$0xff]
    %v115 = vld [vmem:[#allocation5 + $0x10] sm:$0xff]
    %v116 = vld [vmem:[#allocation5 + $0x18] sm:$0xff]
    %vm117 = vcmask 261120
    %v119 = vsel %vm117, %v110, 0
    %v122 = vsel %vm117, %v111, 0
    %124 = vmatprep.subr.mxu0 0.0
    %125 = vmatpush1.msra.mxu0 %v113
    %126 = vmatprep.subr.mxu0 0.0
    %127 = vmatpush1.msra.mxu0 %v114
    %128 = vmatprep.subr.mxu0 0.0
    %129 = vmatpush1.msra.mxu0 %v115
    %130 = vmatprep.subr.mxu0 0.0
    %131 = vmatpush1.msra.mxu0 %v116
    %132 = vmatprep.subr.mxu0 0.0
    %133 = vmatpush1.msra.mxu0 0.0
    %134 = vmatprep.subr.mxu0 0.0
    %135 = vmatpush1.msra.mxu0 0.0
    %136 = vmatprep.subr.mxu0 0.0
    %137 = vmatpush1.msra.mxu0 0.0
    %138 = vmatprep.subr.mxu0 0.0
    %139 = vmatpush1.msra.mxu0 0.0
    %140 = vmatprep.subr.mxu0 0.0
    %141 = vmatpush1.msra.mxu0 0.0
    %142 = vmatprep.subr.mxu0 0.0
    %143 = vmatpush1.msra.mxu0 0.0
    %144 = vmatprep.subr.mxu0 0.0
    %145 = vmatpush1.msra.mxu0 0.0
    %146 = vmatprep.subr.mxu0 0.0
    %147 = vmatpush1.msra.mxu0 0.0
    %148 = vmatprep.subr.mxu0 0.0
    %149 = vmatpush1.msra.mxu0 0.0
    %150 = vmatprep.subr.mxu0 0.0
    %151 = vmatpush1.msra.mxu0 0.0
    %152 = vmatprep.subr.mxu0 0.0
    %153 = vmatpush1.msra.mxu0 0.0
    %154 = vmatprep.subr.mxu0 0.0
    %155 = vmatpush1.msra.mxu0 0.0
    %156 = vmatprep.subr.mxu0 0.0
    %157 = vmatpush1.msra.mxu0 0.0
    %158 = vmatprep.subr.mxu0 0.0
    %159 = vmatpush1.msra.mxu0 0.0
    %160 = vmatprep.subr.mxu0 0.0
    %161 = vmatpush1.msra.mxu0 0.0
    %162 = vmatprep.subr.mxu0 0.0
    %163 = vmatpush1.msra.mxu0 0.0
    %164 = vmatprep.subr.mxu0 0.0
    %165 = vmatpush1.msra.mxu0 0.0
    %166 = vmatprep.subr.mxu0 0.0
    %167 = vmatpush1.msra.mxu0 0.0
    %168 = vmatprep.subr.mxu0 0.0
    %169 = vmatpush1.msra.mxu0 0.0
    %170 = vmatprep.subr.mxu0 0.0
    %171 = vmatpush1.msra.mxu0 0.0
    %172 = vmatprep.subr.mxu0 0.0
    %173 = vmatpush1.msra.mxu0 0.0
    %174 = vmatprep.subr.mxu0 0.0
    %175 = vmatpush1.msra.mxu0 0.0
    %176 = vmatprep.subr.mxu0 0.0
    %177 = vmatpush1.msra.mxu0 0.0
    %178 = vmatprep.subr.mxu0 0.0
    %179 = vmatpush1.msra.mxu0 0.0
    %180 = vmatprep.subr.mxu0 0.0
    %181 = vmatpush1.msra.mxu0 0.0
    %182 = vmatprep.subr.mxu0 0.0
    %183 = vmatpush1.msra.mxu0 0.0
    %184 = vmatprep.subr.mxu0 0.0
    %185 = vmatpush1.msra.mxu0 0.0
    %186 = vmatprep.subr.mxu0 0.0
    %187 = vmatpush1.msra.mxu0 0.0
    %188 = vmatprep.mubr.f32.mxu0 0.0
    %189 = vmatmul.mubr.f32.gmra.mrb[0].mxu0 %v119
    %v190 = vpop.f32.mrb[0].mxu0
    %v191 = vadd.f32 0.0, %v190
    %v192 = vpop.f32.mrb[0].mxu0
    %193 = vmatprep.mubr.f32.mxu0 0.0
    %194 = vmatmul.mubr.f32.gmra.mrb[0].mxu0 %v122
    %v195 = vpop.f32.mrb[0].mxu0
    %v196 = vadd.f32 0.0, %v195
    %v197 = vpop.f32.mrb[0].mxu0
    %198 = vdwg.mxu0
    %v199 = vld [vmem:[%s1] sm:$0x3]
    %v200 = vld [vmem:[#allocation7] sm:$0xff]
    %v201 = vld [vmem:[#allocation7 + $0x8] sm:$0xff]
    %v202 = vld [vmem:[#allocation7 + $0x10] sm:$0xff]
    %v203 = vld [vmem:[#allocation7 + $0x18] sm:$0xff]
    %v204 = vld [vmem:[%s6] sm:$0x1]
    %v206 = vlaneseq
    %v207 = vshrl.u32 %v206, 7
    %v208 = vsub.s32 0, %v207
    %v209 = vrot.slane %v204, %v208
    %v212 = vsel %vm117, %v199, 0
    %214 = vmatprep.subr.mxu0 0.0
    %215 = vmatpush1.msra.mxu0 %v200
    %216 = vmatprep.subr.mxu0 0.0
    %217 = vmatpush1.msra.mxu0 %v201
    %218 = vmatprep.subr.mxu0 0.0
    %219 = vmatpush1.msra.mxu0 %v202
    %220 = vmatprep.subr.mxu0 0.0
    %221 = vmatpush1.msra.mxu0 %v203
    %222 = vmatprep.subr.mxu0 0.0
    %223 = vmatpush1.msra.mxu0 0.0
    %224 = vmatprep.subr.mxu0 0.0
    %225 = vmatpush1.msra.mxu0 0.0
    %226 = vmatprep.subr.mxu0 0.0
    %227 = vmatpush1.msra.mxu0 0.0
    %228 = vmatprep.subr.mxu0 0.0
    %229 = vmatpush1.msra.mxu0 0.0
    %230 = vmatprep.subr.mxu0 0.0
    %231 = vmatpush1.msra.mxu0 0.0
    %232 = vmatprep.subr.mxu0 0.0
    %233 = vmatpush1.msra.mxu0 0.0
    %234 = vmatprep.subr.mxu0 0.0
    %235 = vmatpush1.msra.mxu0 0.0
    %236 = vmatprep.subr.mxu0 0.0
    %237 = vmatpush1.msra.mxu0 0.0
    %238 = vmatprep.subr.mxu0 0.0
    %239 = vmatpush1.msra.mxu0 0.0
    %240 = vmatprep.subr.mxu0 0.0
    %241 = vmatpush1.msra.mxu0 0.0
    %242 = vmatprep.subr.mxu0 0.0
    %243 = vmatpush1.msra.mxu0 0.0
    %244 = vmatprep.subr.mxu0 0.0
    %245 = vmatpush1.msra.mxu0 0.0
    %246 = vmatprep.subr.mxu0 0.0
    %247 = vmatpush1.msra.mxu0 0.0
    %248 = vmatprep.subr.mxu0 0.0
    %249 = vmatpush1.msra.mxu0 0.0
    %250 = vmatprep.subr.mxu0 0.0
    %251 = vmatpush1.msra.mxu0 0.0
    %252 = vmatprep.subr.mxu0 0.0
    %253 = vmatpush1.msra.mxu0 0.0
    %254 = vmatprep.subr.mxu0 0.0
    %255 = vmatpush1.msra.mxu0 0.0
    %256 = vmatprep.subr.mxu0 0.0
    %257 = vmatpush1.msra.mxu0 0.0
    %258 = vmatprep.subr.mxu0 0.0
    %259 = vmatpush1.msra.mxu0 0.0
    %260 = vmatprep.subr.mxu0 0.0
    %261 = vmatpush1.msra.mxu0 0.0
    %262 = vmatprep.subr.mxu0 0.0
    %263 = vmatpush1.msra.mxu0 0.0
    %264 = vmatprep.subr.mxu0 0.0
    %265 = vmatpush1.msra.mxu0 0.0
    %266 = vmatprep.subr.mxu0 0.0
    %267 = vmatpush1.msra.mxu0 0.0
    %268 = vmatprep.subr.mxu0 0.0
    %269 = vmatpush1.msra.mxu0 0.0
    %270 = vmatprep.subr.mxu0 0.0
    %271 = vmatpush1.msra.mxu0 0.0
    %272 = vmatprep.subr.mxu0 0.0
    %273 = vmatpush1.msra.mxu0 0.0
    %274 = vmatprep.subr.mxu0 0.0
    %275 = vmatpush1.msra.mxu0 0.0
    %276 = vmatprep.subr.mxu0 0.0
    %277 = vmatpush1.msra.mxu0 0.0
    %278 = vmatprep.mubr.f32.mxu0 0.0
    %279 = vmatmul.mubr.f32.gmra.mrb[0].mxu0 %v212
    %v280 = vpop.f32.mrb[0].mxu0
    %v281 = vadd.f32 %v209, %v280
    %v282 = vpop.f32.mrb[0].mxu0
    %283 = vdwg.mxu0
    %v286 = vunpack.c.l.s4 1966171168
    %v287 = vunpack.c.0.s8 %v286
    %v288 = vlaneseq
    %v289 = vshrl.u32 %v288, 7
    %v290 = vsub.s32 %v287, %v289
    %v291 = vrot.slane %v281, %v290
    %v292 = vcombine.high %v291, %v291
    %v294 = vunpack.c.l.s4 1966171168
    %v295 = vunpack.c.0.s8 %v294
    %v296 = vlaneseq
    %v297 = vshrl.u32 %v296, 7
    %v298 = vsub.s32 %v295, %v297
    %v299 = vrot.slane %v291, %v298
    %v301 = vunpack.c.l.s4 1966171168
    %v302 = vunpack.c.0.s8 %v301
    %v303 = vlaneseq
    %v304 = vshrl.u32 %v303, 7
    %v305 = vsub.s32 %v302, %v304
    %v306 = vrot.slane %v292, %v305
    %v307 = vlaneseq
    %v308 = vshrl.u32 %v307, 7
    %v309 = vsub.s32 0, %v308
    %v310 = vrot.slane %v299, %v309
    %v311 = vlaneseq
    %v312 = vshrl.u32 %v311, 7
    %v313 = vsub.s32 0, %v312
    %v314 = vrot.slane %v306, %v313
    %v317 = vadd.f32 %v191, %v310
    %v318 = vadd.f32 %v196, %v314
    %v319 = vtanh.pop %v317
    %v320 = vtanh.pop %v318
    %v321 = vld [vmem:[%s7] sm:$0x1]
    %v323 = vlaneseq
    %v324 = vshrl.u32 %v323, 7
    %v325 = vsub.s32 0, %v324
    %v326 = vrot.slane %v321, %v325
    %v328 = vmul.f32 %v319, %v326
    %v329 = vmul.f32 %v320, %v326
    %v330 = vsel %vm117, %v328, 0.0
    %331 = vadd.xlane.f32.xlu0 %v330
    %v332 = vpop.xlane.xlu0 %331
    %v333 = vsel %vm117, %v329, 0.0
    %334 = vadd.xlane.f32.xlu0 %v333
    %v335 = vpop.xlane.xlu0 %334
    %v338 = vlaneseq
    %v339 = vand.u32 %v338, 127
    %v340 = vlaneseq
    %v341 = vshrl.u32 %v340, 7
    %v342 = vsub.s32 %v339, %v341
    %v343 = vrot.slane %v332, %v342
    %v344 = vlaneseq
    %v345 = vshrl.u32 %v344, 7
    %v346 = vsub.s32 %v339, %v345
    %v347 = vrot.slane %v335, %v346
    %vm348 = vcmask 1041409
    %v349 = vsel %vm348, %v347, %v343
    %vm351 = vcmask 58368
    %v352 = vsel %vm351, %v349, -inf
    %353 = vmax.xlane.f32.xlu0 %v352
    %v354 = vpop.xlane.xlu0 %353
    %v356 = vlaneseq
    %v357 = vshrl.u32 %v356, 7
    %v358 = vsub.s32 0, %v357
    %v359 = vrot.slane %v354, %v358
    %v360 = vlaneseq
    %v361 = vshrl.u32 %v360, 7
    %v362 = vsub.s32 1, %v361
    %v363 = vrot.slane %v354, %v362
    %v366 = vsub.f32 %v332, %v359
    %v367 = vsub.f32 %v335, %v363
    %v368 = vmul.f32 %v366, 1.442695
    %v369 = vpow.pop %v368
    %v370 = vmul.f32 %v367, 1.442695
    %v371 = vpow.pop %v370
    %374 = vset.pattern.permute.xlu0 0
    %375 = vperm.xlu0 %374, %v369
    %v376 = vpop.permute.xlu0 %375
    %377 = vset.pattern.permute.xlu0 0
    %378 = vperm.xlu0 %377, %v371
    %v379 = vpop.permute.xlu0 %378
    %v380 = vlaneseq
    %v381 = vshrl.u32 %v380, 7
    %v382 = vsub.s32 %v339, %v381
    %v383 = vrot.slane %v376, %v382
    %v384 = vlaneseq
    %v385 = vshrl.u32 %v384, 7
    %v386 = vsub.s32 %v339, %v385
    %v387 = vrot.slane %v379, %v386
    %v388 = vsel %vm348, %v387, %v383
    %v390 = vsel %vm351, %v388, 0.0
    %391 = vadd.xlane.f32.xlu0 %v390
    %v392 = vpop.xlane.xlu0 %391
    %v393 = vrcp.pop %v392
    %v394 = vmul.f32 %v392, %v393
    %v395 = vsub.f32 2.0, %v394
    %v396 = vmul.f32 %v393, %v395
    %v398 = vlaneseq
    %v399 = vshrl.u32 %v398, 7
    %v400 = vsub.s32 0, %v399
    %v401 = vrot.slane %v396, %v400
    %v402 = vlaneseq
    %v403 = vshrl.u32 %v402, 7
    %v404 = vsub.s32 1, %v403
    %v405 = vrot.slane %v396, %v404
    %v408 = vmul.f32 %v369, %v401
    %v409 = vmul.f32 %v371, %v405
    %411 = vset.pattern.permute.xlu0 0
    %412 = vperm.xlu0 %411, %v408
    %v413 = vpop.permute.xlu0 %412
    %416 = vset.pattern.permute.xlu0 0
    %417 = vperm.xlu0 %416, %v409
    %v418 = vpop.permute.xlu0 %417
    %v420 = vmul.f32 %v413, %v110
    %v421 = vmul.f32 %v418, %v111
    %v422 = vsel %vm117, %v420, 0.0
    %v423 = vrot.slane %v422, 4
    %v424 = vadd.f32 %v422, %v423
    %v425 = vrot.slane %v424, 2
    %v426 = vadd.f32 %v424, %v425
    %v427 = vrot.slane %v426, 1
    %v428 = vadd.f32 %v426, %v427
    %v429 = vsel %vm117, %v421, 0.0
    %v430 = vrot.slane %v429, 4
    %v431 = vadd.f32 %v429, %v430
    %v432 = vrot.slane %v431, 2
    %v433 = vadd.f32 %v431, %v432
    %v434 = vrot.slane %v433, 1
    %v435 = vadd.f32 %v433, %v434
    %v436 = vld [vmem:[#allocation8] sm:$0xff]
    %v437 = vld [vmem:[#allocation8 + $0x8] sm:$0xff]
    %v438 = vld [vmem:[#allocation8 + $0x10] sm:$0xff]
    %v439 = vld [vmem:[#allocation8 + $0x18] sm:$0xff]
    %v440 = vld [vmem:[%s3] sm:$0x3]
    %v441 = vld [vmem:[#allocation10] sm:$0xff]
    %v442 = vld [vmem:[#allocation10 + $0x8] sm:$0xff]
    %v443 = vld [vmem:[#allocation10 + $0x10] sm:$0xff]
    %v444 = vld [vmem:[#allocation10 + $0x18] sm:$0xff]
    %v445 = vld [vmem:[#allocation10 + $0x20] sm:$0xff]
    %v446 = vld [vmem:[#allocation10 + $0x28] sm:$0xff]
    %vm447 = vcmask 392192
    %v449 = vsel %vm447, %v440, 0
    %451 = vmatprep.subr.mxu0 0.0
    %452 = vmatpush1.msra.mxu0 %v441
    %453 = vmatprep.subr.mxu0 0.0
    %454 = vmatpush1.msra.mxu0 %v442
    %455 = vmatprep.subr.mxu0 0.0
    %456 = vmatpush1.msra.mxu0 %v443
    %457 = vmatprep.subr.mxu0 0.0
    %458 = vmatpush1.msra.mxu0 %v444
    %459 = vmatprep.subr.mxu0 0.0
    %460 = vmatpush1.msra.mxu0 %v445
    %461 = vmatprep.subr.mxu0 0.0
    %462 = vmatpush1.msra.mxu0 %v446
    %463 = vmatprep.subr.mxu0 0.0
    %464 = vmatpush1.msra.mxu0 0.0
    %465 = vmatprep.subr.mxu0 0.0
    %466 = vmatpush1.msra.mxu0 0.0
    %467 = vmatprep.subr.mxu0 0.0
    %468 = vmatpush1.msra.mxu0 0.0
    %469 = vmatprep.subr.mxu0 0.0
    %470 = vmatpush1.msra.mxu0 0.0
    %471 = vmatprep.subr.mxu0 0.0
    %472 = vmatpush1.msra.mxu0 0.0
    %473 = vmatprep.subr.mxu0 0.0
    %474 = vmatpush1.msra.mxu0 0.0
    %475 = vmatprep.subr.mxu0 0.0
    %476 = vmatpush1.msra.mxu0 0.0
    %477 = vmatprep.subr.mxu0 0.0
    %478 = vmatpush1.msra.mxu0 0.0
    %479 = vmatprep.subr.mxu0 0.0
    %480 = vmatpush1.msra.mxu0 0.0
    %481 = vmatprep.subr.mxu0 0.0
    %482 = vmatpush1.msra.mxu0 0.0
    %483 = vmatprep.subr.mxu0 0.0
    %484 = vmatpush1.msra.mxu0 0.0
    %485 = vmatprep.subr.mxu0 0.0
    %486 = vmatpush1.msra.mxu0 0.0
    %487 = vmatprep.subr.mxu0 0.0
    %488 = vmatpush1.msra.mxu0 0.0
    %489 = vmatprep.subr.mxu0 0.0
    %490 = vmatpush1.msra.mxu0 0.0
    %491 = vmatprep.subr.mxu0 0.0
    %492 = vmatpush1.msra.mxu0 0.0
    %493 = vmatprep.subr.mxu0 0.0
    %494 = vmatpush1.msra.mxu0 0.0
    %495 = vmatprep.subr.mxu0 0.0
    %496 = vmatpush1.msra.mxu0 0.0
    %497 = vmatprep.subr.mxu0 0.0
    %498 = vmatpush1.msra.mxu0 0.0
    %499 = vmatprep.subr.mxu0 0.0
    %500 = vmatpush1.msra.mxu0 0.0
    %501 = vmatprep.subr.mxu0 0.0
    %502 = vmatpush1.msra.mxu0 0.0
    %503 = vmatprep.subr.mxu0 0.0
    %504 = vmatpush1.msra.mxu0 0.0
    %505 = vmatprep.subr.mxu0 0.0
    %506 = vmatpush1.msra.mxu0 0.0
    %507 = vmatprep.subr.mxu0 0.0
    %508 = vmatpush1.msra.mxu0 0.0
    %509 = vmatprep.subr.mxu0 0.0
    %510 = vmatpush1.msra.mxu0 0.0
    %511 = vmatprep.subr.mxu0 0.0
    %512 = vmatpush1.msra.mxu0 0.0
    %513 = vmatprep.subr.mxu0 0.0
    %514 = vmatpush1.msra.mxu0 0.0
    %515 = vmatprep.mubr.f32.mxu0 0.0
    %516 = vmatmul.mubr.f32.gmra.mrb[0].mxu0 %v449
    %v517 = vpop.f32.mrb[0].mxu0
    %v518 = vadd.f32 0.0, %v517
    %v519 = vpop.f32.mrb[0].mxu0
    %520 = vdwg.mxu0
    %v523 = vsel %vm348, %v435, %v428
    %v524 = vsel %vm117, %v523, 0
    %526 = vmatprep.subr.mxu0 0.0
    %527 = vmatpush1.msra.mxu0 %v436
    %528 = vmatprep.subr.mxu0 0.0
    %529 = vmatpush1.msra.mxu0 %v437
    %530 = vmatprep.subr.mxu0 0.0
    %531 = vmatpush1.msra.mxu0 %v438
    %532 = vmatprep.subr.mxu0 0.0
    %533 = vmatpush1.msra.mxu0 %v439
    %534 = vmatprep.subr.mxu0 0.0
    %535 = vmatpush1.msra.mxu0 0.0
    %536 = vmatprep.subr.mxu0 0.0
    %537 = vmatpush1.msra.mxu0 0.0
    %538 = vmatprep.subr.mxu0 0.0
    %539 = vmatpush1.msra.mxu0 0.0
    %540 = vmatprep.subr.mxu0 0.0
    %541 = vmatpush1.msra.mxu0 0.0
    %542 = vmatprep.subr.mxu0 0.0
    %543 = vmatpush1.msra.mxu0 0.0
    %544 = vmatprep.subr.mxu0 0.0
    %545 = vmatpush1.msra.mxu0 0.0
    %546 = vmatprep.subr.mxu0 0.0
    %547 = vmatpush1.msra.mxu0 0.0
    %548 = vmatprep.subr.mxu0 0.0
    %549 = vmatpush1.msra.mxu0 0.0
    %550 = vmatprep.subr.mxu0 0.0
    %551 = vmatpush1.msra.mxu0 0.0
    %552 = vmatprep.subr.mxu0 0.0
    %553 = vmatpush1.msra.mxu0 0.0
    %554 = vmatprep.subr.mxu0 0.0
    %555 = vmatpush1.msra.mxu0 0.0
    %556 = vmatprep.subr.mxu0 0.0
    %557 = vmatpush1.msra.mxu0 0.0
    %558 = vmatprep.subr.mxu0 0.0
    %559 = vmatpush1.msra.mxu0 0.0
    %560 = vmatprep.subr.mxu0 0.0
    %561 = vmatpush1.msra.mxu0 0.0
    %562 = vmatprep.subr.mxu0 0.0
    %563 = vmatpush1.msra.mxu0 0.0
    %564 = vmatprep.subr.mxu0 0.0
    %565 = vmatpush1.msra.mxu0 0.0
    %566 = vmatprep.subr.mxu0 0.0
    %567 = vmatpush1.msra.mxu0 0.0
    %568 = vmatprep.subr.mxu0 0.0
    %569 = vmatpush1.msra.mxu0 0.0
    %570 = vmatprep.subr.mxu0 0.0
    %571 = vmatpush1.msra.mxu0 0.0
    %572 = vmatprep.subr.mxu0 0.0
    %573 = vmatpush1.msra.mxu0 0.0
    %574 = vmatprep.subr.mxu0 0.0
    %575 = vmatpush1.msra.mxu0 0.0
    %576 = vmatprep.subr.mxu0 0.0
    %577 = vmatpush1.msra.mxu0 0.0
    %578 = vmatprep.subr.mxu0 0.0
    %579 = vmatpush1.msra.mxu0 0.0
    %580 = vmatprep.subr.mxu0 0.0
    %581 = vmatpush1.msra.mxu0 0.0
    %582 = vmatprep.subr.mxu0 0.0
    %583 = vmatpush1.msra.mxu0 0.0
    %584 = vmatprep.subr.mxu0 0.0
    %585 = vmatpush1.msra.mxu0 0.0
    %586 = vmatprep.subr.mxu0 0.0
    %587 = vmatpush1.msra.mxu0 0.0
    %588 = vmatprep.subr.mxu0 0.0
    %589 = vmatpush1.msra.mxu0 0.0
    %590 = vmatprep.mubr.f32.mxu0 0.0
    %591 = vmatmul.mubr.f32.gmra.mrb[0].mxu0 %v524
    %v592 = vpop.f32.mrb[0].mxu0
    %v593 = vadd.f32 %v518, %v592
    %v594 = vpop.f32.mrb[0].mxu0
    %595 = vdwg.mxu0
    %v596 = vld [vmem:[%s10] sm:$0x1]
    %v598 = vlaneseq
    %v599 = vshrl.u32 %v598, 7
    %v600 = vsub.s32 0, %v599
    %v601 = vrot.slane %v596, %v600
    %v603 = vadd.f32 %v593, %v601
    %v604 = vxor.u32 %v603, 2147483648
    %v605 = vmul.f32 %v604, 1.442695
    %v606 = vpow.pop %v605
    %v607 = vadd.f32 %v606, 1.0
    %v608 = vrcp.pop %v607
    %v609 = vmul.f32 1.0, %v608
    %v610 = vtanh.pop %v603
    %612 = vrot.lane.b32.xlu0 %v112, 32
    %v613 = vpop.permute.xlu0 %612
    %v615 = vmul.f32 %v609, %v613
    %617 = vrot.lane.b32.xlu0 %v610, 64
    %v618 = vpop.permute.xlu0 %617
    %v620 = vmul.f32 %v609, %v618
    %622 = vrot.lane.b32.xlu0 %v620, 32
    %v623 = vpop.permute.xlu0 %622
    %v625 = vadd.f32 %v615, %v623
    %v626 = vtanh.pop %v625
    %628 = vrot.lane.b32.xlu0 %v626, 64
    %v629 = vpop.permute.xlu0 %628
    %v631 = vmul.f32 %v609, %v629
    %633 = vrot.lane.b32.xlu0 %v631, 32
    %v634 = vpop.permute.xlu0 %633
    %v636 = vsel %vm117, %v634, %v625
    %vm637 = vcmask 517120
    %638 = vst.msk [vmem:[#allocation11] sm:$0x3] %vm637, %v636
    %v639 = vlaneseq
    %v640 = vshrl.u32 %v639, 7
    %v641 = vsub.s32 %v339, %v640
    %v642 = vrot.slane %v413, %v641
    %v643 = vlaneseq
    %v644 = vshrl.u32 %v643, 7
    %v645 = vsub.s32 %v339, %v644
    %v646 = vrot.slane %v418, %v645
    %v647 = vsel %vm348, %v646, %v642
    %649 = vst.msk [vmem:[#allocation12] sm:$0x3] %vm351, %v647
    // Predicated region
    $region66: #{tpu_custom_call.1} parent=1 // pred_check
      _
    $region67: #{tpu_custom_call.1} parent=1 // pred_check_branch
      %651 = sbr.rel (0) target = $region69
    $region68: #{tpu_custom_call.1} parent=1 // pred_region
      %s653 = ssub.s32 32, 32
      %654 = vsyncadd [#allocation4], %s653
      %s656 = sshll.u32 [#allocation11], 4
      %s657 = int_to_ptr.vmem [resolvable:$true] %s656
      %659 = dma.vmem_to_hbm [thread:$0]  %s657, 32, %s11, [#allocation4]
    $region69: #{tpu_custom_call.1} parent=1 // pred_fallthru
      _
    // Predicated region
    $region70: #{tpu_custom_call.1} parent=1 // pred_check
      _
    $region71: #{tpu_custom_call.1} parent=1 // pred_check_branch
      %661 = sbr.rel (0) target = $region73
    $region72: #{tpu_custom_call.1} parent=1 // pred_region
      %s663 = ssub.s32 32, 32
      %664 = vsyncadd [#allocation13], %s663
      %s666 = sshll.u32 [#allocation12], 4
      %s667 = int_to_ptr.vmem [resolvable:$true] %s666
      %669 = dma.vmem_to_hbm [thread:$0]  %s667, 32, %s12, [#allocation13]
    $region73: #{tpu_custom_call.1} parent=1 // pred_fallthru
      _
    // Predicated region
    $region74: #{tpu_custom_call.1} parent=1 // pred_check
      _
    $region75: #{tpu_custom_call.1} parent=1 // pred_check_branch
      %671 = sbr.rel (0) target = $region77
    $region76: #{tpu_custom_call.1} parent=1 // pred_region
      %672 = dma.done [#allocation4], 32
    $region77: #{tpu_custom_call.1} parent=1 // pred_fallthru
      _
    // Predicated region
    $region78: #{tpu_custom_call.1} parent=1 // pred_check
      _
    $region79: #{tpu_custom_call.1} parent=1 // pred_check_branch
      %674 = sbr.rel (0) target = $region81
    $region80: #{tpu_custom_call.1} parent=1 // pred_region
      %675 = dma.done [#allocation13], 32
    $region81: #{tpu_custom_call.1} parent=1 // pred_fallthru
      _
    %676 = vsyncpa [#allocation3], 1
    %677 = vsyncpa [#allocation6], 1
    %678 = vsyncpa [#allocation9], 1
    %679 = vsyncpa [#allocation4], 1
    %680 = vsyncpa [#allocation13], 1

</llo_original>
